<compile_context>
chip_gen: v6e
topology: v6e:2x2x1
jax: 0.10.0
libtpu: 0.0.40
codegen_flags: <defaults>
</compile_context>

<pallas_src>
import functools

import jax
import jax.numpy as jnp
from jax.experimental import pallas as pl
from jax.experimental.pallas import tpu as pltpu

_VMEM_LIMIT = 48 * 1024 * 1024


def _round_up(x, m):
    return ((x + m - 1) // m) * m


# ---------------------------------------------------------------------------
# 1x1 conv == channel matmul, tiled over (batch, N); weight block resident.
# ---------------------------------------------------------------------------
def _conv1x1_kernel(x_ref, w_ref, o_ref):
    x = x_ref[0].astype(jnp.bfloat16)            # (C, tile_n)
    w = w_ref[...]                               # (C, C) bf16 (pre-cast, resident)
    o_ref[0] = jnp.dot(w, x, preferred_element_type=jnp.float32).astype(o_ref.dtype)


def _conv1x1(x_flat, conv_w_bf16, tile_n):
    b, c, n = x_flat.shape
    assert n % tile_n == 0
    return pl.pallas_call(
        _conv1x1_kernel,
        out_shape=jax.ShapeDtypeStruct((b, c, n), jnp.bfloat16),
        grid_spec=pltpu.PrefetchScalarGridSpec(
            num_scalar_prefetch=0,
            grid=(b, n // tile_n),
            in_specs=[
                pl.BlockSpec((1, c, tile_n), lambda bi, ni: (bi, 0, ni)),
                pl.BlockSpec((c, c), lambda bi, ni: (0, 0)),   # resident weight
            ],
            out_specs=pl.BlockSpec((1, c, tile_n), lambda bi, ni: (bi, 0, ni)),
        ),
        compiler_params=pltpu.CompilerParams(
            dimension_semantics=("parallel", "parallel"),
            vmem_limit_bytes=_VMEM_LIMIT,
        ),
    )(x_flat, conv_w_bf16)


# ---------------------------------------------------------------------------
# Flash-style position attention: grid (B, Nq_tiles, Nk_tiles).
# ---------------------------------------------------------------------------
def _pos_attn_kernel(bvq_ref, bvk_ref, xq_ref, gamma_ref, o_ref,
                     m_ref, l_ref, acc_ref, *, n_valid, tk, padded):
    ki = pl.program_id(2)

    @pl.when(ki == 0)
    def _():
        m_ref[...] = jnp.full(m_ref.shape, -jnp.inf, dtype=jnp.float32)
        l_ref[...] = jnp.zeros(l_ref.shape, dtype=jnp.float32)
        acc_ref[...] = jnp.zeros(acc_ref.shape, dtype=jnp.float32)

    bvq = bvq_ref[0]                             # (C, tq) bf16, queries on lanes
    bvk = bvk_ref[0]                             # (C, tk) bf16, keys on lanes

    # logits_t[j, i] = sum_c bvk[c, j] * bvq[c, i]  -> (tk, tq)
    # Contracting dim 0 of both operands = transposed-LHS MXU feed (no explicit
    # (N, N) transpose and no (N, C) intermediates); verified to lower cleanly.
    logits_t = jax.lax.dot_general(
        bvk, bvq, (((0,), (0,)), ((), ())),
        preferred_element_type=jnp.float32)

    if padded:
        # Cheap key-padding mask: (tk, 1) iota/compare -> additive bias
        # broadcast into logits.  Padding always lives in the last key tile
        # and that tile always has >= 1 valid key, so the running max stays
        # finite.
        j_idx = ki * tk + jax.lax.broadcasted_iota(jnp.int32, (tk, 1), 0)
        key_bias = jnp.where(j_idx < n_valid, 0.0, -jnp.inf).astype(jnp.float32)
        logits_t = logits_t + key_bias

    m_prev = m_ref[...]                                              # (1, tq)
    m_new = jnp.maximum(m_prev, jnp.max(logits_t, axis=0, keepdims=True))
    alpha = jnp.exp(m_prev - m_new)                                  # (1, tq)
    p_t = jnp.exp(logits_t - m_new)                                  # (tk, tq) f32

    l_ref[...] = alpha * l_ref[...] + jnp.sum(p_t, axis=0, keepdims=True)
    # acc[c, i] += sum_j bvk[c, j] * p_t[j, i]  (unnormalized E, shape (C, tq))
    acc_ref[...] = alpha * acc_ref[...] + jnp.dot(
        bvk, p_t.astype(jnp.bfloat16), preferred_element_type=jnp.float32)
    m_ref[...] = m_new

    @pl.when(ki == pl.num_programs(2) - 1)
    def _():
        g = gamma_ref[0]
        # Fold the softmax denominator into the (C, tq) output (EUP slot).
        e = acc_ref[...] * pl.reciprocal(l_ref[...], approx=True)
        o_ref[0] = (g * e + xq_ref[0].astype(jnp.float32)).astype(o_ref.dtype)


def _pick_tiles(n, tq_max, tk_max):
    """Returns (n_p, tq, tk) with n_p a common multiple of tq and tk."""
    assert tq_max % 128 == 0 and tk_max % 128 == 0 and tk_max % tq_max == 0
    n_128 = _round_up(max(n, 1), 128)
    if n_128 >= tk_max:
        return _round_up(n_128, tk_max), tq_max, tk_max
    # Small N: one key tile spanning all of n_p; tq = largest 128-multiple
    # divisor of n_p that is <= tq_max.
    n_p = n_128
    tq = 128
    t = 256
    while t <= min(tq_max, n_p):
        if n_p % t == 0:
            tq = t
        t += 128
    return n_p, tq, n_p


def da_position_attention(x_nchw, conv_w, gamma, *, tq_max=512, tk_max=2048):
    """x_nchw: (B, C, H, W); conv_w: (C, C) 1x1 conv weight (bias=False); gamma scalar.

    Default tiles (tq=512, tk=2048) keep the per-step footprint ~15-20 MiB at
    C=512, which fits all of v5e/v6e/v7x VMEM with double buffering.
    """
    b, c, h, w = x_nchw.shape
    n = h * w

    # Pad channels to a bf16-packing multiple, positions to a tile multiple.
    c_p = max(_round_up(c, 16), 16)
    n_p, tq, tk = _pick_tiles(n, tq_max, tk_max)

    x_flat = x_nchw.reshape(b, c, n)
    x_pad = jnp.pad(x_flat, ((0, 0), (0, c_p - c), (0, n_p - n)))
    w_pad = jnp.pad(conv_w, ((0, c_p - c), (0, c_p - c))).astype(jnp.bfloat16)
    gamma_arr = jnp.asarray(gamma, jnp.float32).reshape(1)

    # convB(x) — hoisted out of the attention loop; module uses convB for B, C, D.
    # Output is bf16 so the attention loop streams keys at half the HBM traffic.
    bv = _conv1x1(x_pad, w_pad, tile_n=tk)                 # (b, c_p, n_p) bf16

    grid = (b, n_p // tq, n_p // tk)
    q_spec = pl.BlockSpec((1, c_p, tq), lambda bi, qi, ki: (bi, 0, qi))
    k_spec = pl.BlockSpec((1, c_p, tk), lambda bi, qi, ki: (bi, 0, ki))

    kernel = functools.partial(_pos_attn_kernel, n_valid=n, tk=tk,
                               padded=(n_p != n))

    out_pad = pl.pallas_call(
        kernel,
        out_shape=jax.ShapeDtypeStruct((b, c_p, n_p), x_nchw.dtype),
        grid_spec=pltpu.PrefetchScalarGridSpec(
            num_scalar_prefetch=0,
            grid=grid,
            in_specs=[
                q_spec,                                               # bv, query tile (bf16)
                k_spec,                                               # bv, key tile (bf16)
                q_spec,                                               # x, residual tile (f32)
                pl.BlockSpec(memory_space=pltpu.MemorySpace.SMEM),    # gamma scalar
            ],
            out_specs=q_spec,
            scratch_shapes=[
                pltpu.VMEM((1, tq), jnp.float32),     # running max
                pltpu.VMEM((1, tq), jnp.float32),     # running denominator
                pltpu.VMEM((c_p, tq), jnp.float32),   # unnormalized E accumulator
            ],
        ),
        compiler_params=pltpu.CompilerParams(
            dimension_semantics=("parallel", "parallel", "arbitrary"),
            vmem_limit_bytes=_VMEM_LIMIT,
        ),
    )(bv, bv, x_pad, gamma_arr)

    return out_pad[:, :c, :n].reshape(b, c, h, w)


def _reference(x_nchw, conv_w, gamma):
    b, c, h, w = x_nchw.shape
    n = h * w
    xf = x_nchw.reshape(b, c, n)
    bv = jnp.einsum("oc,bcn->bon", conv_w, xf)            # convB(x), 1x1 no bias
    logits = jnp.einsum("bcn,bcm->bnm", bv, bv)           # B^T C
    s = jax.nn.softmax(logits, axis=2)
    e = jnp.einsum("bcn,bmn->bcm", bv, s)                 # D @ S^T
    out = gamma * e + xf
    return out.reshape(b, c, h, w)


if __name__ == "__main__":
    key = jax.random.PRNGKey(0)
    k_x, k_w, k_x2, k_x3 = jax.random.split(key, 4)

    B, C, H, W = 2, 4, 16, 16
    x = jax.random.normal(k_x, (B, C, H, W), dtype=jnp.float32)
    conv_w = jax.random.normal(k_w, (C, C), dtype=jnp.float32) * 0.1

    # gamma = 0 (module initialization) — residual path must be exact.
    out0 = jax.block_until_ready(da_position_attention(x, conv_w, jnp.float32(0.0)))
    ref0 = _reference(x, conv_w, jnp.float32(0.0))
    assert out0.shape == (B, C, H, W)
    assert jnp.allclose(out0, ref0, atol=1e-5, rtol=1e-5), "mismatch (gamma=0)"

    # gamma != 0 exercises the attention branch (bf16 bv -> looser tolerance).
    out1 = jax.block_until_ready(da_position_attention(x, conv_w, jnp.float32(0.7)))
    ref1 = _reference(x, conv_w, jnp.float32(0.7))
    assert jnp.allclose(out1, ref1, atol=2e-2, rtol=2e-2), "mismatch (gamma=0.7)"

    # Non-128-multiple spatial size exercises N padding + key masking.
    x2 = jax.random.normal(k_x2, (1, C, 10, 10), dtype=jnp.float32)
    out2 = jax.block_until_ready(da_position_attention(x2, conv_w, jnp.float32(0.5)))
    ref2 = _reference(x2, conv_w, jnp.float32(0.5))
    assert jnp.allclose(out2, ref2, atol=2e-2, rtol=2e-2), "mismatch (padded N)"

    # Larger spatial size exercises the multi-q-tile online-softmax path.
    x3 = jax.random.normal(k_x3, (1, C, 32, 32), dtype=jnp.float32)
    out3 = jax.block_until_ready(da_position_attention(x3, conv_w, jnp.float32(0.3)))
    ref3 = _reference(x3, conv_w, jnp.float32(0.3))
    assert jnp.allclose(out3, ref3, atol=2e-2, rtol=2e-2), "mismatch (multi-tile)"

    print("KERNEL_OK")
</pallas_src>

<mosaic_0001>
module attributes {stable_mosaic.version = 11 : i64} {
  func.func @_conv1x1_kernel(%arg0: i32, %arg1: i32, %arg2: memref<1x16x256xf32, #tpu.memory_space<vmem>>, %arg3: memref<16x16xbf16, #tpu.memory_space<vmem>>, %arg4: memref<1x16x256xbf16, #tpu.memory_space<vmem>>) attributes {dimension_semantics = [#tpu.dimension_semantics<parallel>, #tpu.dimension_semantics<parallel>], iteration_bounds = array<i64: 2, 1>, scalar_prefetch = 0 : i64, scratch_operands = 0 : i64, tpu.core_type = #tpu.core_type<tc>, window_params = [{transform_indices = @transform_0, window_bounds = array<i64: 1, 16, 256>}, {pipeline_mode = #tpu.pipeline_mode<synchronous>, transform_indices = @transform_1, window_bounds = array<i64: 16, 16>}, {transform_indices = @transform_2, window_bounds = array<i64: 1, 16, 256>}]} {
    %c0 = arith.constant 0 : index
    %c0_0 = arith.constant 0 : index
    %c0_1 = arith.constant 0 : index
    %0 = vector.load %arg2[%c0, %c0_0, %c0_1] : memref<1x16x256xf32, #tpu.memory_space<vmem>>, vector<1x16x256xf32>
    %1 = vector.shape_cast %0 : vector<1x16x256xf32> to vector<16x256xf32>
    %2 = arith.truncf %1 : vector<16x256xf32> to vector<16x256xbf16>
    %c0_2 = arith.constant 0 : index
    %c0_3 = arith.constant 0 : index
    %3 = vector.load %arg3[%c0_2, %c0_3] : memref<16x16xbf16, #tpu.memory_space<vmem>>, vector<16x16xbf16>
    %cst = arith.constant dense<0.000000e+00> : vector<16x256xf32>
    %4 = tpu.matmul %3, %2, %cst {dimension_numbers = #tpu.dot_dimension_numbers<[1], [0], [0], [1], [0, 0, 1, 1], [], []>} : vector<16x16xbf16>, vector<16x256xbf16>, vector<16x256xf32> -> vector<16x256xf32>
    %5 = arith.truncf %4 : vector<16x256xf32> to vector<16x256xbf16>
    %c0_4 = arith.constant 0 : index
    %c0_5 = arith.constant 0 : index
    %c0_6 = arith.constant 0 : index
    %6 = vector.load %arg4[%c0_4, %c0_5, %c0_6] : memref<1x16x256xbf16, #tpu.memory_space<vmem>>, vector<1x16x256xbf16>
    %7 = vector.shape_cast %6 : vector<1x16x256xbf16> to vector<16x256xbf16>
    %8 = vector.shape_cast %5 : vector<16x256xbf16> to vector<1x16x256xbf16>
    tpu.vector_store %arg4[%c0_4, %c0_5, %c0_6], %8 {strides = array<i32>} : memref<1x16x256xbf16, #tpu.memory_space<vmem>>, vector<1x16x256xbf16>,
    return
  }
  func.func @transform_0(%arg0: i32, %arg1: i32) -> (i32, i32, i32) {
    %c0_i32 = arith.constant 0 : i32
    %c0_i32_0 = arith.constant 0 : i32
    return %arg0, %c0_i32, %arg1 : i32, i32, i32
  }
  func.func @transform_1(%arg0: i32, %arg1: i32) -> (i32, i32) {
    %c0_i32 = arith.constant 0 : i32
    %c0_i32_0 = arith.constant 0 : i32
    %c0_i32_1 = arith.constant 0 : i32
    return %c0_i32, %c0_i32_0 : i32, i32
  }
  func.func @transform_2(%arg0: i32, %arg1: i32) -> (i32, i32, i32) {
    %c0_i32 = arith.constant 0 : i32
    %c0_i32_0 = arith.constant 0 : i32
    return %arg0, %c0_i32, %arg1 : i32, i32, i32
  }
}

</mosaic_0001>

<llo_original>
// kernel: tpu_custom_call.1
$region0: #{tpu_custom_call.1}
  #allocation0 [shape = 'u32[]', space=smem, size = 0x4, offset = 0x4, fixed_abs, tag = 'smem constant byte address 0x4 - core index']
  #allocation1 [shape = 'u32[144,128]{1,0:T(1,128)}', space=vmem, size = 0x12000, scoped, tag = 'internal scratch']
  %s0 = inlined_call_operand.hbm [shape: f32[2,16,256], index: 0, kind: input, shape index: {}]
  %s1 = inlined_call_operand.hbm [shape: bf16[16,16], index: 1, kind: input, shape index: {}]
  %s2 = inlined_call_operand.hbm [shape: bf16[2,16,256], index: 2, kind: output, shape index: {}]
  %s3 = sld [smem:[#allocation0]]
  $region49: #{tpu_custom_call.1} parent=0
    _
  %s5 = ssub.s32 1, %s3
  %s6 = scalar_select 0, %s5, %s3
  $region1: #{tpu_custom_call.1} parent=0
    #allocation2 [shape = 'u8[32768]{0}', space=vmem, size = 0x8000, scoped, tag = 'input window, operand 0']
    #allocation3 [shape = 's32[2]{0}', space=sflag, size = 0x8, scoped, tag = 'scoped memory for tpu_custom_call.1']
    #allocation4 [shape = 's32[2]{0}', space=sflag, size = 0x8, scoped, tag = 'scoped memory for tpu_custom_call.1']
    #allocation5 [shape = 'u8[4096]{0}', space=vmem, size = 0x1000, scoped, tag = 'input window, operand 1, single buffered']
    #allocation6 [shape = 's32[1]{0}', space=sflag, size = 0x4, scoped, tag = 'scoped memory for tpu_custom_call.1']
    #allocation7 [shape = 'u8[16384]{0}', space=vmem, size = 0x4000, scoped, tag = 'output window, operand 0']
    %7 = vsyncpa [#allocation3], 0
    %s8 = scalar_lea.sflag [#allocation3], 1
    %9 = vsyncpa %s8, 0
    %10 = vsyncpa [#allocation6], 0
    %11 = vsyncpa [#allocation4], 0
    %s12 = scalar_lea.sflag [#allocation4], 1
    %13 = vsyncpa %s12, 0
    loop: start=0, step=1, limit=4
    $region2: #{tpu_custom_call.1} parent=1 // loop_pre_header
      _
    $region3: #{tpu_custom_call.1} parent=1 // loop_header
      %s15 = sphi 0, %s19
      %p16 = scmp.ge.s32.totalorder %s15, 4
      %s22 = sphi 0, %s34
      %s23 = sphi 0, %s30
      %s24 = sphi 0, %s22
      %s25 = sphi 0, %s23
      %s26 = sphi 0, %s24
      %s27 = sphi 0, %s25
      %s39 = sphi 0, %s41
      %s42 = sphi 0, %s39
      %s43 = sphi 0, %s42
      %s59 = sphi 0, %s43
      %s63 = sphi 0, %s63
      %s65 = sphi 0, %s63
      %s66 = sphi 0, %s65
      %s80 = sphi 0, %s66
      %s88 = sphi 0, %s90
      %s91 = sphi 0, %s88
      %s92 = sphi 0, %s91
      %s108 = sphi 0, %s92
    $region4: #{tpu_custom_call.1} parent=1 // loop_header_branch
      %18 = sbr.rel (%p16) target = $region8
    $region5: #{tpu_custom_call.1} parent=1 // loop_body
      %s20 = ssub.s32 %s15, 1
      %s21 = ssub.s32 %s15, 2
      %s28 = sadd.s32 1, %s23
      %p29 = scmp.ge.s32.totalorder %s28, 1
      %s30 = scalar_select %p29, 0, %s28
      %s31 = sadd.s32 1, %s22
      %s32 = scalar_select %p29, %s31, %s22
      %p33 = scmp.ge.s32.totalorder %s32, 2
      %s34 = scalar_select %p33, 0, %s32
      %s35 = ssub.s32 %s22, %s34
      %s36 = ssub.s32 %s23, %s30
      %s37 = sor.u32 %s35, %s36
      %p38 = scmp.eq.s32.totalorder %s37, 0
      %s40 = sadd.s32 %s39, 1
      %s41 = scalar_select %p38, %s39, %s40
      %p44 = pneg %p38
      %p45 = scmp.eq.s32.totalorder %s15, 1
      %p46 = por %p44, %p45
      %p47 = scmp.ne.s32.totalorder %s39, %s42
      %p48 = scmp.eq.s32.totalorder %s15, 0
      %p49 = por %p47, %p48
      %p50 = scmp.ne.s32.totalorder %s39, %s42
      %p51 = scmp.eq.s32.totalorder %s20, 1
      %p52 = por %p50, %p51
      %p53 = scmp.ne.s32.totalorder %s42, %s43
      %p54 = scmp.eq.s32.totalorder %s20, 0
      %p55 = por %p53, %p54
      %p56 = scmp.ne.s32.totalorder %s42, %s43
      %p57 = scmp.eq.s32.totalorder %s21, 1
      %p58 = por %p56, %p57
      %p60 = scmp.ne.s32.totalorder %s43, %s59
      %p61 = scmp.eq.s32.totalorder %s21, 0
      %p62 = por %p60, %p61
      %s64 = sadd.s32 %s63, 1
      %p67 = scmp.eq.s32.totalorder %s15, 1
      %p68 = scmp.ne.s32.totalorder %s63, %s65
      %p69 = scmp.eq.s32.totalorder %s15, 0
      %p70 = por %p68, %p69
      %p71 = scmp.ne.s32.totalorder %s63, %s65
      %p72 = scmp.eq.s32.totalorder %s20, 1
      %p73 = por %p71, %p72
      %p74 = scmp.ne.s32.totalorder %s65, %s66
      %p75 = scmp.eq.s32.totalorder %s20, 0
      %p76 = por %p74, %p75
      %p77 = scmp.ne.s32.totalorder %s65, %s66
      %p78 = scmp.eq.s32.totalorder %s21, 1
      %p79 = por %p77, %p78
      %p81 = scmp.ne.s32.totalorder %s66, %s80
      %p82 = scmp.eq.s32.totalorder %s21, 0
      %p83 = por %p81, %p82
      %s84 = ssub.s32 %s22, %s34
      %s85 = ssub.s32 %s23, %s30
      %s86 = sor.u32 %s84, %s85
      %p87 = scmp.eq.s32.totalorder %s86, 0
      %s89 = sadd.s32 %s88, 1
      %s90 = scalar_select %p87, %s88, %s89
      %p93 = pneg %p87
      %p94 = scmp.eq.s32.totalorder %s15, 1
      %p95 = por %p93, %p94
      %p96 = scmp.ne.s32.totalorder %s88, %s91
      %p97 = scmp.eq.s32.totalorder %s15, 0
      %p98 = por %p96, %p97
      %p99 = scmp.ne.s32.totalorder %s88, %s91
      %p100 = scmp.eq.s32.totalorder %s20, 1
      %p101 = por %p99, %p100
      %p102 = scmp.ne.s32.totalorder %s91, %s92
      %p103 = scmp.eq.s32.totalorder %s20, 0
      %p104 = por %p102, %p103
      %p105 = scmp.ne.s32.totalorder %s91, %s92
      %p106 = scmp.eq.s32.totalorder %s21, 1
      %p107 = por %p105, %p106
      %p109 = scmp.ne.s32.totalorder %s92, %s108
      %p110 = scmp.eq.s32.totalorder %s21, 0
      %p111 = por %p109, %p110
      %p112 = scmp.le.s32.totalorder 1, %s15
      %p113 = scmp.lt.s32.totalorder %s15, 3
      %p114 = pnand %p112, %p113
      %p115 = pneg %p114
      // Predicated region
      $region9: #{tpu_custom_call.1} parent=5 // pred_check
        _
      $region10: #{tpu_custom_call.1} parent=5 // pred_check_branch
        %117 = sbr.rel (%p114) target = $region12
      $region11: #{tpu_custom_call.1} parent=5 // pred_region
        %s118 = ssub.s32 %s15, 1
        // Predicated region
        $region13: #{tpu_custom_call.1} parent=11 // pred_check
          %p119 = pneg %p76
        $region14: #{tpu_custom_call.1} parent=11 // pred_check_branch
          %121 = sbr.rel (%p119) target = $region16
        $region15: #{tpu_custom_call.1} parent=11 // pred_region
          %s123 = ssub.s32 128, 128
          %124 = vsyncadd [#allocation6], %s123
          %s125 = sshll.u32 [#allocation5], 4
          %s126 = int_to_ptr.vmem [resolvable:$true] %s125
          %131 = dma.hbm_to_vmem [thread:$0]  %s1, 128, %s126, [#allocation6], 64, 64, 4
        $region16: #{tpu_custom_call.1} parent=11 // pred_fallthru
          _
      $region12: #{tpu_custom_call.1} parent=5 // pred_fallthru
        _
      %p132 = scmp.lt.s32.totalorder %s15, 2
      // Predicated region
      $region17: #{tpu_custom_call.1} parent=5 // pred_check
        %p133 = pneg %p132
      $region18: #{tpu_custom_call.1} parent=5 // pred_check_branch
        %135 = sbr.rel (%p133) target = $region20
      $region19: #{tpu_custom_call.1} parent=5 // pred_region
        // Predicated region
        $region21: #{tpu_custom_call.1} parent=19 // pred_check
          %p136 = pneg %p49
        $region22: #{tpu_custom_call.1} parent=19 // pred_check_branch
          %138 = sbr.rel (%p136) target = $region24
        $region23: #{tpu_custom_call.1} parent=19 // pred_region
          %s139 = sand.u32 %s39, 1
          %s140 = scalar_lea.sflag [#allocation3], %s139
          %s141 = sand.u32 %s39, 1
          %s142 = smul.addr %s141, 32
          %s143 = scalar_lea.vmem [#allocation2], %s142
          %s144 = smul.u32 2, %s23
          %s146 = ssub.s32 512, 512
          %147 = vsyncadd %s140, %s146
          %s148 = smul.addr %s22, 4
          %s149 = sadd.s32 %s144, %s148
          %s150 = smul.addr %s149, 128
          %s151 = scalar_lea.hbm %s0, %s150
          %s152 = sshll.u32 %s143, 4
          %s153 = int_to_ptr.vmem [resolvable:$true] %s152
          %158 = dma.hbm_to_vmem [thread:$0]  %s151, 512, %s153, %s140, 256, 256, 16
        $region24: #{tpu_custom_call.1} parent=19 // pred_fallthru
          _
      $region20: #{tpu_custom_call.1} parent=5 // pred_fallthru
        _
      %p159 = scmp.le.s32.totalorder 1, %s15
      %p160 = scmp.lt.s32.totalorder %s15, 3
      %p161 = pnand %p159, %p160
      %p162 = pneg %p161
      // Predicated region
      $region25: #{tpu_custom_call.1} parent=5 // pred_check
        _
      $region26: #{tpu_custom_call.1} parent=5 // pred_check_branch
        %164 = sbr.rel (%p161) target = $region28
      $region27: #{tpu_custom_call.1} parent=5 // pred_region
        %s165 = ssub.s32 %s15, 1
        %s166 = sand.u32 %s42, 1
        %s167 = scalar_lea.sflag [#allocation3], %s166
        %s168 = sand.u32 %s42, 1
        %s169 = smul.addr %s168, 32
        %s170 = scalar_lea.vmem [#allocation2], %s169
        // Predicated region
        $region29: #{tpu_custom_call.1} parent=27 // pred_check
          %p171 = pneg %p55
        $region30: #{tpu_custom_call.1} parent=27 // pred_check_branch
          %173 = sbr.rel (%p171) target = $region32
        $region31: #{tpu_custom_call.1} parent=27 // pred_region
          %174 = dma.done %s167, 512
        $region32: #{tpu_custom_call.1} parent=27 // pred_fallthru
          _
        // Predicated region
        $region33: #{tpu_custom_call.1} parent=27 // pred_check
          %p175 = pneg %p76
        $region34: #{tpu_custom_call.1} parent=27 // pred_check_branch
          %177 = sbr.rel (%p175) target = $region36
        $region35: #{tpu_custom_call.1} parent=27 // pred_region
          %178 = dma.done [#allocation6], 128
        $region36: #{tpu_custom_call.1} parent=27 // pred_fallthru
          _
        %s179 = sand.u32 %s42, 1
        %s180 = scalar_lea.sflag [#allocation3], %s179
        %s181 = sand.u32 %s42, 1
        %s182 = smul.addr %s181, 32
        %s183 = scalar_lea.vmem [#allocation2], %s182
        %p184 = pneg %p55
        %p185 = pneg %p52
        %p186 = pneg %p76
        %p187 = pneg %p73
        %p188 = pneg %p104
        %p189 = pneg %p101
        %s190 = sand.u32 %s91, 1
        %s191 = scalar_lea.sflag [#allocation4], %s190
        %s192 = sand.u32 %s91, 1
        %s193 = smul.addr %s192, 16
        %s194 = scalar_lea.vmem [#allocation7], %s193
        %s195 = smul.u32 2, %s25
        %s196 = smul.u32 2, %s25
        %v198 = vld [vmem:[%s170] sm:$0xff]
        %v199 = vld [vmem:[%s170 + $0x8] sm:$0xff]
        %v200 = vld [vmem:[%s170 + $0x10] sm:$0xff]
        %v201 = vld [vmem:[%s170 + $0x18] sm:$0xff]
        %v202 = vpack.c.bf16 %v200, %v198
        %v203 = vpack.c.bf16 %v201, %v199
        %v204 = vld [vmem:[#allocation5] sm:$0xf]
        %v205 = vld [vmem:[#allocation5 + $0x4] sm:$0xf]
        %v208 = vunpack.c.l.b16 %v204
        %v209 = vunpack.c.l.b16 %v205
        %v210 = vpack.c.b16 %v209, %v208
        %vm211 = vcmask 130048
        %v213 = vsel %vm211, %v210, 0
        %215 = vmatprep.subr.bf16.mxu0 0
        %216 = vmatpush1.bf16.msra.mxu0 0
        %217 = vmatprep.subr.bf16.mxu0 0
        %218 = vmatpush1.bf16.msra.mxu0 0
        %219 = vmatprep.subr.bf16.mxu0 0
        %220 = vmatpush1.bf16.msra.mxu0 0
        %221 = vmatprep.subr.bf16.mxu0 0
        %222 = vmatpush1.bf16.msra.mxu0 0
        %223 = vmatprep.subr.bf16.mxu0 0
        %224 = vmatpush1.bf16.msra.mxu0 0
        %225 = vmatprep.subr.bf16.mxu0 0
        %226 = vmatpush1.bf16.msra.mxu0 0
        %227 = vmatprep.subr.bf16.mxu0 0
        %228 = vmatpush1.bf16.msra.mxu0 0
        %229 = vmatprep.subr.bf16.mxu0 %v203
        %230 = vmatpush1.bf16.msra.mxu0 %v202
        %231 = vmatprep.subr.bf16.mxu0 0
        %232 = vmatpush2.bf16.msra.mxu0 0
        %233 = vmatprep.subr.bf16.mxu0 0
        %234 = vmatpush2.bf16.msra.mxu0 0
        %235 = vmatprep.subr.bf16.mxu0 0
        %236 = vmatpush2.bf16.msra.mxu0 0
        %237 = vmatprep.subr.bf16.mxu0 0
        %238 = vmatpush2.bf16.msra.mxu0 0
        %239 = vmatprep.subr.bf16.mxu0 0
        %240 = vmatpush2.bf16.msra.mxu0 0
        %241 = vmatprep.subr.bf16.mxu0 0
        %242 = vmatpush2.bf16.msra.mxu0 0
        %243 = vmatprep.subr.bf16.mxu0 0
        %244 = vmatpush2.bf16.msra.mxu0 0
        %245 = vmatprep.subr.bf16.mxu0 0
        %246 = vmatpush2.bf16.msra.mxu0 0
        %247 = vmatprep.mubr.bf16.mxu0 0
        %248 = vmatmul.mubr.bf16.gmra.mxu0 %v213
        %v249 = vpop.f32.mrf.mxu0
        %v250 = vadd.f32 0.0, %v249
        %v251 = vpop.f32.mrf.mxu0
        %v252 = vadd.f32 0.0, %v251
        %v253 = vpop.f32.mrf.mxu0
        %v254 = vadd.f32 0.0, %v253
        %v255 = vpop.f32.mrf.mxu0
        %v256 = vadd.f32 0.0, %v255
        %257 = vdwg.mxu0
        %v258 = vpack.c.bf16 %v254, %v250
        %v259 = vpack.c.bf16 %v256, %v252
        %v262 = vunpack.c.l.b16 %v258
        %v263 = vunpack.c.l.b16 %v259
        %v264 = vunpack.c.h.b16 %v258
        %v265 = vunpack.c.h.b16 %v259
        %v266 = vpack.c.b16 %v263, %v262
        %v267 = vpack.c.b16 %v265, %v264
        %270 = vst [vmem:[%s194] sm:$0xff] %v266
        %271 = vst [vmem:[%s194 + $0x8] sm:$0xff] %v267
        %s272 = sand.u32 %s91, 1
        %s273 = scalar_lea.sflag [#allocation4], %s272
        %s274 = sand.u32 %s91, 1
        %s275 = smul.addr %s274, 16
        %s276 = scalar_lea.vmem [#allocation7], %s275
        // Predicated region
        $region37: #{tpu_custom_call.1} parent=27 // pred_check
          %p277 = pneg %p101
        $region38: #{tpu_custom_call.1} parent=27 // pred_check_branch
          %279 = sbr.rel (%p277) target = $region40
        $region39: #{tpu_custom_call.1} parent=27 // pred_region
          %s280 = smul.u32 2, %s25
          %s282 = ssub.s32 256, 256
          %283 = vsyncadd %s273, %s282
          %s284 = smul.addr %s24, 4
          %s285 = sadd.s32 %s280, %s284
          %s286 = smul.addr %s285, 64
          %s287 = scalar_lea.hbm %s2, %s286
          %s288 = sshll.u32 %s276, 4
          %s289 = int_to_ptr.vmem [resolvable:$true] %s288
          %294 = dma.vmem_to_hbm [thread:$0]  %s289, 256, %s287, %s273, 128, 128, 8
        $region40: #{tpu_custom_call.1} parent=27 // pred_fallthru
          _
      $region28: #{tpu_custom_call.1} parent=5 // pred_fallthru
        _
      %p295 = scmp.le.s32.totalorder 2, %s15
      // Predicated region
      $region41: #{tpu_custom_call.1} parent=5 // pred_check
        %p296 = pneg %p295
      $region42: #{tpu_custom_call.1} parent=5 // pred_check_branch
        %298 = sbr.rel (%p296) target = $region44
      $region43: #{tpu_custom_call.1} parent=5 // pred_region
        %s299 = ssub.s32 %s15, 2
        // Predicated region
        $region45: #{tpu_custom_call.1} parent=43 // pred_check
          %p300 = pneg %p107
        $region46: #{tpu_custom_call.1} parent=43 // pred_check_branch
          %302 = sbr.rel (%p300) target = $region48
        $region47: #{tpu_custom_call.1} parent=43 // pred_region
          %s303 = sand.u32 %s92, 1
          %s304 = scalar_lea.sflag [#allocation4], %s303
          %s305 = sand.u32 %s92, 1
          %s306 = smul.addr %s305, 16
          %s307 = scalar_lea.vmem [#allocation7], %s306
          %308 = dma.done %s304, 256
        $region48: #{tpu_custom_call.1} parent=43 // pred_fallthru
          _
      $region44: #{tpu_custom_call.1} parent=5 // pred_fallthru
        _
    $region6: #{tpu_custom_call.1} parent=1 // loop_footer
      %s19 = sadd.s32 1, %s15
    $region7: #{tpu_custom_call.1} parent=1 // loop_footer_branch
      %14 = sbr.rel target = $region3
    $region8: #{tpu_custom_call.1} parent=1 // loop_exit
      _
    %309 = vsyncpa [#allocation3], 1
    %s310 = scalar_lea.sflag [#allocation3], 1
    %311 = vsyncpa %s310, 1
    %312 = vsyncpa [#allocation6], 1
    %313 = vsyncpa [#allocation4], 1
    %s314 = scalar_lea.sflag [#allocation4], 1
    %315 = vsyncpa %s314, 1

</llo_original>
